<compile_context>
chip_gen: v5e
topology: v5e:2x2
jax: 0.10.0
libtpu: 0.0.40
codegen_flags: <defaults>
</compile_context>

<pallas_src>
import functools
import math

import jax
import jax.numpy as jnp
from jax.experimental import pallas as pl
from jax.experimental.pallas import tpu as pltpu

_LANE = 128
_SUB = 8
_BLOCK_BYTES = 2 * 1024 * 1024  # ~2 MiB blocks: ~85% HBM roofline, fits all gens


def _round_up(x, m):
    return ((x + m - 1) // m) * m


def _bf16_math_ok():
    # bf16 VALU/EUP exists on v6e/v7x; v5e must upcast to f32.
    try:
        kind = jax.devices()[0].device_kind.lower()
        return ("v6" in kind) or ("v7" in kind)
    except Exception:
        return False


# ----------------------------------------------------------------------------
# Kernel: fused elementwise GeneralizedCELoss (all gce variants, static switch).
# ----------------------------------------------------------------------------
def gce_kernel(logits_ref, targets_ref, loss_ref, *, q, gce, compute_dtype):
    logits = logits_ref[...].astype(compute_dtype)
    targets = targets_ref[...].astype(compute_dtype)

    # nn.L1Loss(reduction='none') -> elementwise absolute error.
    # logits.detach() only changes gradients; the forward value is identical,
    # so a single |logits - targets| serves both criterion() calls.
    # TODO(synk): if a custom VJP is ever attached, stop-gradient the weight
    # branch to mirror the PyTorch detach().
    l1 = jnp.abs(logits - targets)

    if gce == "tanh":
        if q == 0.0:
            # torch: (1/l1)**0 == 1 everywhere (incl. l1==0) -> tanh(1).
            w = jnp.full_like(l1, math.tanh(1.0))
        else:
            # tanh((1/l1)^q) == tanh(exp(-q*log(l1))): no divide, all EUP ops.
            # l1==0: log->-inf, exp->+inf, tanh->1, matching (1/0)^q = inf.
            w = jnp.tanh(jnp.exp((-q) * jnp.log(l1)))
    elif gce == "sigmoid":
        w = 2.0 * jax.nn.sigmoid(-l1)
    elif gce == "test1":
        w = jnp.exp(-l1 * (1.0 / q))
    elif gce == "test2":
        denom = 1.0 + (q * q) * (l1 * l1)
        # EUP approximate reciprocal keeps the divide off the VALU slot.
        w = pl.reciprocal(denom.astype(jnp.float32), approx=True).astype(l1.dtype)
    else:
        # PyTorch else-branch: loss = 0 * criterion(logits, targets)
        w = jnp.zeros_like(l1)

    loss_ref[...] = (w * l1).astype(loss_ref.dtype)


# ----------------------------------------------------------------------------
# Wrapper: lane-dense 2-D view + byte-budgeted 2-D tiling.
# ----------------------------------------------------------------------------
def generalized_ce_loss(logits, targets, *, q, gce="tanh"):
    assert logits.shape == targets.shape, (logits.shape, targets.shape)
    orig_shape = logits.shape
    out_dtype = logits.dtype
    itemsize = jnp.dtype(out_dtype).itemsize
    size = int(math.prod(orig_shape)) if orig_shape else 1

    if out_dtype == jnp.bfloat16 and _bf16_math_ok():
        compute_dtype = jnp.bfloat16
    else:
        compute_dtype = jnp.float32

    # ---- lane-dense 2-D view: last dim must be a multiple of 128 -------------
    last = orig_shape[-1] if len(orig_shape) >= 1 else 1
    if len(orig_shape) >= 2 and last % _LANE == 0:
        n = last
        m = size // n
        x2 = logits.reshape(m, n)
        t2 = targets.reshape(m, n)
        padded = False
    else:
        # Flatten and re-chunk into (m, n) with n a multiple of 128; pad tail.
        n = min(_round_up(max(size, 1), _LANE), 1024)
        m = -(-size // n)  # cdiv
        pad = m * n - size
        xf = logits.reshape(-1)
        tf = targets.reshape(-1)
        if pad:
            xf = jnp.pad(xf, (0, pad))
            tf = jnp.pad(tf, (0, pad))
        x2 = xf.reshape(m, n)
        t2 = tf.reshape(m, n)
        padded = True

    # ---- byte-budgeted 2-D block selection -----------------------------------
    block_elems = max(_BLOCK_BYTES // itemsize, _LANE * _SUB)
    bn = n if n <= 2048 else 2048                      # multiple of 128 (or full n)
    bm = max(((block_elems // bn) // _SUB) * _SUB, _SUB)  # multiple of 8 sublanes

    total_bytes = m * n * itemsize
    if m <= bm:
        if total_bytes > (1 << 20) and m >= 2 * _SUB:
            # Bandwidth-bound but single row-block: split in two so the
            # "parallel" axis can shard across both TensorCores on v7x.
            bm = _round_up(-(-m // 2), _SUB)
        else:
            bm = m  # full-dim block (legal even if not a multiple of 8)

    grid = (pl.cdiv(m, bm), pl.cdiv(n, bn))

    transc = {"tanh": 3, "sigmoid": 1, "test1": 1, "test2": 1}.get(gce, 0)
    cost = pl.CostEstimate(
        flops=5 * m * n,
        transcendentals=transc * m * n,
        bytes_accessed=3 * m * n * itemsize,
    )

    kernel = functools.partial(
        gce_kernel, q=float(q), gce=gce, compute_dtype=compute_dtype)

    out = pl.pallas_call(
        kernel,
        out_shape=jax.ShapeDtypeStruct((m, n), out_dtype),
        grid=grid,
        in_specs=[
            pl.BlockSpec((bm, bn), lambda i, j: (i, j)),
            pl.BlockSpec((bm, bn), lambda i, j: (i, j)),
        ],
        out_specs=pl.BlockSpec((bm, bn), lambda i, j: (i, j)),
        compiler_params=pltpu.CompilerParams(
            dimension_semantics=("parallel", "parallel"),
            vmem_limit_bytes=32 * 1024 * 1024,
        ),
        cost_estimate=cost,
    )(x2, t2)

    if padded:
        return out.reshape(-1)[:size].reshape(orig_shape)
    return out.reshape(orig_shape)


# ----------------------------------------------------------------------------
# Pure-JAX reference, written exactly like the PyTorch source (for validation).
# ----------------------------------------------------------------------------
def generalized_ce_loss_ref(logits, targets, *, q, gce="tanh"):
    l1 = jnp.abs(logits.astype(jnp.float32) - targets.astype(jnp.float32))
    if gce == "tanh":
        w = jnp.tanh((1.0 / l1) ** q)
    elif gce == "sigmoid":
        w = 2.0 * jax.nn.sigmoid(-l1)
    elif gce == "test1":
        w = jnp.exp(-l1 / q)
    elif gce == "test2":
        w = 1.0 / (1.0 + q * q * l1 * l1)
    else:
        w = jnp.zeros_like(l1)
    return (w * l1).astype(logits.dtype)


if __name__ == "__main__":
    key = jax.random.PRNGKey(0)
    k0, k1, k2, k3 = jax.random.split(key, 4)
    Q = 0.7

    # Two small test shapes:
    #  - (8, 128): lane-dense fast path (no padding)
    #  - (2, 4, 16, 16): non-multiple-of-128 last dim -> flatten/pad/re-chunk path
    cases = [
        (jax.random.normal(k0, (8, 128), jnp.float32),
         jax.random.normal(k1, (8, 128), jnp.float32)),
        (jax.random.normal(k2, (2, 4, 16, 16), jnp.float32),
         jax.random.normal(k3, (2, 4, 16, 16), jnp.float32)),
    ]

    ok = True
    for logits, targets in cases:
        for mode in ("tanh", "sigmoid", "test1", "test2", "none"):
            out = generalized_ce_loss(logits, targets, q=Q, gce=mode)
            jax.block_until_ready(out)
            ref = generalized_ce_loss_ref(logits, targets, q=Q, gce=mode)
            if mode == "test2":
                rtol, atol = 2e-3, 2e-3   # approx EUP reciprocal
            else:
                rtol, atol = 1e-4, 1e-5
            if not bool(jnp.allclose(out, ref, rtol=rtol, atol=atol)):
                ok = False
                print(f"MISMATCH shape={logits.shape} gce='{mode}'")

    if ok:
        print("KERNEL_OK")
</pallas_src>

<mosaic_0001>
module attributes {stable_mosaic.version = 11 : i64} {
  func.func @gce_kernel(%arg0: i32, %arg1: i32, %arg2: memref<8x128xf32, #tpu.memory_space<vmem>>, %arg3: memref<8x128xf32, #tpu.memory_space<vmem>>, %arg4: memref<8x128xf32, #tpu.memory_space<vmem>>) attributes {dimension_semantics = [#tpu.dimension_semantics<parallel>, #tpu.dimension_semantics<parallel>], iteration_bounds = array<i64: 1, 1>, scalar_prefetch = 0 : i64, scratch_operands = 0 : i64, tpu.core_type = #tpu.core_type<tc>, window_params = [{transform_indices = @transform_0, window_bounds = array<i64: 8, 128>}, {transform_indices = @transform_1, window_bounds = array<i64: 8, 128>}, {transform_indices = @transform_2, window_bounds = array<i64: 8, 128>}]} {
    %c0 = arith.constant 0 : index
    %c0_0 = arith.constant 0 : index
    %0 = vector.load %arg2[%c0, %c0_0] : memref<8x128xf32, #tpu.memory_space<vmem>>, vector<8x128xf32>
    %c0_1 = arith.constant 0 : index
    %c0_2 = arith.constant 0 : index
    %1 = vector.load %arg3[%c0_1, %c0_2] : memref<8x128xf32, #tpu.memory_space<vmem>>, vector<8x128xf32>
    %2 = arith.subf %0, %1 : vector<8x128xf32>
    %3 = math.absf %2 : vector<8x128xf32>
    %4 = math.log %3 : vector<8x128xf32>
    %cst = arith.constant -0.699999988 : f32
    %5 = vector.broadcast %cst : f32 to vector<8x128xf32>
    %6 = arith.mulf %5, %4 : vector<8x128xf32>
    %7 = math.exp %6 : vector<8x128xf32>
    %8 = math.tanh %7 : vector<8x128xf32>
    %9 = arith.mulf %8, %3 : vector<8x128xf32>
    %c0_3 = arith.constant 0 : index
    %c0_4 = arith.constant 0 : index
    %10 = vector.load %arg4[%c0_3, %c0_4] : memref<8x128xf32, #tpu.memory_space<vmem>>, vector<8x128xf32>
    tpu.vector_store %arg4[%c0_3, %c0_4], %9 {strides = array<i32>} : memref<8x128xf32, #tpu.memory_space<vmem>>, vector<8x128xf32>,
    return
  }
  func.func @transform_0(%arg0: i32, %arg1: i32) -> (i32, i32) {
    %c0_i32 = arith.constant 0 : i32
    return %arg0, %arg1 : i32, i32
  }
  func.func @transform_1(%arg0: i32, %arg1: i32) -> (i32, i32) {
    %c0_i32 = arith.constant 0 : i32
    return %arg0, %arg1 : i32, i32
  }
  func.func @transform_2(%arg0: i32, %arg1: i32) -> (i32, i32) {
    %c0_i32 = arith.constant 0 : i32
    return %arg0, %arg1 : i32, i32
  }
}

</mosaic_0001>

<llo_original>
// kernel: tpu_custom_call.1
$region0: #{tpu_custom_call.1}
  #allocation0 [shape = 'u32[]', space=smem, size = 0x4, offset = 0x4, fixed_abs, tag = 'smem constant byte address 0x4 - core index']
  #allocation1 [shape = 'u32[72,128]{1,0:T(1,128)}', space=vmem, size = 0x9000, scoped, tag = 'internal scratch']
  %s0 = inlined_call_operand.hbm [shape: f32[8,128], index: 0, kind: input, shape index: {}]
  %s1 = inlined_call_operand.hbm [shape: f32[8,128], index: 1, kind: input, shape index: {}]
  %s2 = inlined_call_operand.hbm [shape: f32[8,128], index: 2, kind: output, shape index: {}]
  %s3 = sld [smem:[#allocation0]]
  $region26: #{tpu_custom_call.1} parent=0
    _
  %s5 = ssub.s32 1, %s3
  %s6 = scalar_select 0, %s5, %s3
  $region1: #{tpu_custom_call.1} parent=0
    #allocation2 [shape = 'u8[4096]{0}', space=vmem, size = 0x1000, scoped, tag = 'input window, operand 0, single buffered']
    #allocation3 [shape = 's32[1]{0}', space=sflag, size = 0x4, scoped, tag = 'scoped memory for tpu_custom_call.1']
    #allocation4 [shape = 's32[1]{0}', space=sflag, size = 0x4, scoped, tag = 'scoped memory for tpu_custom_call.1']
    #allocation5 [shape = 'u8[4096]{0}', space=vmem, size = 0x1000, scoped, tag = 'input window, operand 1, single buffered']
    #allocation6 [shape = 's32[1]{0}', space=sflag, size = 0x4, scoped, tag = 'scoped memory for tpu_custom_call.1']
    #allocation7 [shape = 'u8[4096]{0}', space=vmem, size = 0x1000, scoped, tag = 'output window, operand 0, single buffered']
    %7 = vsyncpa [#allocation3], 0
    %8 = vsyncpa [#allocation6], 0
    %9 = vsyncpa [#allocation4], 0
    // Predicated region
    $region2: #{tpu_custom_call.1} parent=1 // pred_check
      _
    $region3: #{tpu_custom_call.1} parent=1 // pred_check_branch
      %11 = sbr.rel (0) target = $region5
    $region4: #{tpu_custom_call.1} parent=1 // pred_region
      %13 = vsyncadd [#allocation3], 0
      %s15 = sshll.u32 %s0, 4
      %s16 = int_to_ptr.hbm [resolvable:$true] %s15
      %s17 = sshll.u32 [#allocation2], 4
      %s18 = int_to_ptr.vmem [resolvable:$true] %s17
      %20 = dma.hbm_to_vmem [thread:$0]  %s16, 128, %s18, [#allocation3]
    $region5: #{tpu_custom_call.1} parent=1 // pred_fallthru
      _
    // Predicated region
    $region6: #{tpu_custom_call.1} parent=1 // pred_check
      _
    $region7: #{tpu_custom_call.1} parent=1 // pred_check_branch
      %22 = sbr.rel (0) target = $region9
    $region8: #{tpu_custom_call.1} parent=1 // pred_region
      %24 = vsyncadd [#allocation6], 0
      %s26 = sshll.u32 %s1, 4
      %s27 = int_to_ptr.hbm [resolvable:$true] %s26
      %s28 = sshll.u32 [#allocation5], 4
      %s29 = int_to_ptr.vmem [resolvable:$true] %s28
      %31 = dma.hbm_to_vmem [thread:$0]  %s27, 128, %s29, [#allocation6]
    $region9: #{tpu_custom_call.1} parent=1 // pred_fallthru
      _
    // Predicated region
    $region10: #{tpu_custom_call.1} parent=1 // pred_check
      _
    $region11: #{tpu_custom_call.1} parent=1 // pred_check_branch
      %33 = sbr.rel (0) target = $region13
    $region12: #{tpu_custom_call.1} parent=1 // pred_region
      %35 = dma.done [#allocation3], 128
    $region13: #{tpu_custom_call.1} parent=1 // pred_fallthru
      _
    // Predicated region
    $region14: #{tpu_custom_call.1} parent=1 // pred_check
      _
    $region15: #{tpu_custom_call.1} parent=1 // pred_check_branch
      %37 = sbr.rel (0) target = $region17
    $region16: #{tpu_custom_call.1} parent=1 // pred_region
      %39 = dma.done [#allocation6], 128
    $region17: #{tpu_custom_call.1} parent=1 // pred_fallthru
      _
    %v40 = vld [vmem:[#allocation2] sm:$0xff]
    %v41 = vld [vmem:[#allocation5] sm:$0xff]
    %v42 = vsub.f32 %v40, %v41
    %v43 = vand.u32 2147483647, %v42
    %v44 = vlog2.pop %v43
    %v45 = vmul.f32 %v44, 0.6931472
    %v46 = vmul.f32 %v45, -0.7
    %v47 = vmul.f32 %v46, 1.442695
    %v48 = vpow.pop %v47
    %v49 = vtanh.pop %v48
    %v50 = vmul.f32 %v49, %v43
    %51 = vst [vmem:[#allocation7] sm:$0xff] %v50
    // Predicated region
    $region18: #{tpu_custom_call.1} parent=1 // pred_check
      _
    $region19: #{tpu_custom_call.1} parent=1 // pred_check_branch
      %53 = sbr.rel (0) target = $region21
    $region20: #{tpu_custom_call.1} parent=1 // pred_region
      %55 = vsyncadd [#allocation4], 0
      %s57 = sshll.u32 [#allocation7], 4
      %s58 = int_to_ptr.vmem [resolvable:$true] %s57
      %s59 = sshll.u32 %s2, 4
      %s60 = int_to_ptr.hbm [resolvable:$true] %s59
      %62 = dma.vmem_to_hbm [thread:$0]  %s58, 128, %s60, [#allocation4]
    $region21: #{tpu_custom_call.1} parent=1 // pred_fallthru
      _
    // Predicated region
    $region22: #{tpu_custom_call.1} parent=1 // pred_check
      _
    $region23: #{tpu_custom_call.1} parent=1 // pred_check_branch
      %64 = sbr.rel (0) target = $region25
    $region24: #{tpu_custom_call.1} parent=1 // pred_region
      %66 = dma.done [#allocation4], 128
    $region25: #{tpu_custom_call.1} parent=1 // pred_fallthru
      _
    %67 = vsyncpa [#allocation3], 1
    %68 = vsyncpa [#allocation6], 1
    %69 = vsyncpa [#allocation4], 1

</llo_original>
